<compile_context>
chip_gen: v7x
topology: tpu7x:2x2x1
jax: 0.10.0
libtpu: 0.0.40
codegen_flags: <defaults>
</compile_context>

<pallas_src>
import functools

import jax
import jax.numpy as jnp
from jax.experimental import pallas as pl
from jax.experimental.pallas import tpu as pltpu


def _round_up(x, m):
    return (x + m - 1) // m * m


def _loss_kernel(classes_ref, targets_ref, pos_ref, posl_ref, out_ref,
                 acc_nll_ref, acc_mse_ref, *, n, tile_n, tiles_per_core,
                 inv_n, inv_sz):
    c = pl.program_id(0)      # megacore index ("parallel")
    t = pl.program_id(1)      # tile within this core ("arbitrary")

    @pl.when(t == 0)
    def _init():
        acc_nll_ref[...] = jnp.zeros_like(acc_nll_ref)
        acc_mse_ref[...] = jnp.zeros_like(acc_mse_ref)

    # Global row offset of the tile this program is *responsible* for.  The
    # index_maps clamp the loaded block so the DMA stays in-bounds; the row
    # mask below makes clamped / partial-block garbage contribute exactly 0.
    row_start = (c * tiles_per_core + t) * tile_n

    # ---- NLL partial: sum of log-probs gathered at the target column ----
    cls = classes_ref[...].astype(jnp.float32)                 # (tile_n, C)
    tgt = targets_ref[...]                                      # (tile_n, 1) int32
    tn, nc = cls.shape
    row_c = jax.lax.broadcasted_iota(jnp.int32, (tn, nc), 0) + row_start
    col = jax.lax.broadcasted_iota(jnp.int32, (tn, nc), 1)
    pick = jnp.where(jnp.logical_and(row_c < n, col == tgt), cls,
                     jnp.float32(0.0))
    acc_nll_ref[...] += jnp.sum(pick, axis=0, keepdims=True)    # (1, C) lanes

    # ---- MSE partial ----
    p = pos_ref[...].astype(jnp.float32)                        # (tile_n, D)
    q = posl_ref[...].astype(jnp.float32)
    tn2, nd = p.shape
    row_d = jax.lax.broadcasted_iota(jnp.int32, (tn2, nd), 0) + row_start
    diff = p - q
    sq = jnp.where(row_d < n, diff * diff, jnp.float32(0.0))
    acc_mse_ref[...] += jnp.sum(sq, axis=0, keepdims=True)      # (1, D) lanes

    @pl.when(t == pl.num_programs(1) - 1)
    def _finalize():
        nll_sum = jnp.sum(acc_nll_ref[...])
        mse_sum = jnp.sum(acc_mse_ref[...])
        partial = (-nll_sum * inv_n + mse_sum * inv_sz).astype(jnp.float32)
        out_ref[...] = jnp.broadcast_to(partial, out_ref.shape)


def custom_loss(classes, positions, class_list, pos_list, *, tile_n=None):
    """classes: (N, C) log-probs; positions/pos_list: (N, D); class_list: (N,)
    integer class indices.  Returns scalar f32 = nll_loss(mean) + mse_loss(mean).
    bf16 classes/positions are encouraged (halves HBM traffic); accumulation is
    always f32 in-kernel."""
    n, c = classes.shape
    d = positions.shape[1]
    num_cores = 2  # v7x megacore split; becomes a cheap serial outer loop on 1-TC chips.

    # ---- generation-aware VMEM budget / tile size ----
    try:
        vmem_cap = int(pltpu.get_tpu_info().vmem_capacity_bytes)
    except Exception:
        vmem_cap = 64 * 1024 * 1024
    vmem_limit = max(16 * 1024 * 1024, min(vmem_cap // 2, 64 * 1024 * 1024))

    lane_c = _round_up(max(c, 1), 128)
    lane_d = _round_up(max(d, 1), 128)
    # VMEM bytes per row across all (lane-padded) input tiles.
    row_bytes = (lane_c * classes.dtype.itemsize
                 + 128 * 4                                   # (tile_n,1) int32 targets
                 + lane_d * positions.dtype.itemsize
                 + lane_d * pos_list.dtype.itemsize)
    if tile_n is None:
        budget = vmem_limit // 2                             # double-buffered inputs
        tile_n = (budget // (2 * row_bytes)) // 8 * 8
    tile_n = max(8, min(_round_up(int(tile_n), 8), _round_up(n, 8)))

    n_tiles = pl.cdiv(n, tile_n)
    tiles_per_core = pl.cdiv(n_tiles, num_cores)

    targets = class_list.astype(jnp.int32).reshape(n, 1)

    def tile_index(ci, ti):
        # Clamp so the DMA never walks past the last valid block; the kernel's
        # row mask zeroes duplicated / out-of-range rows.
        return jnp.minimum(ci * tiles_per_core + ti, n_tiles - 1)

    kernel = functools.partial(
        _loss_kernel,
        n=int(n), tile_n=int(tile_n), tiles_per_core=int(tiles_per_core),
        inv_n=float(1.0 / n), inv_sz=float(1.0 / (n * d)),
    )

    bytes_accessed = (classes.size * classes.dtype.itemsize
                      + positions.size * positions.dtype.itemsize
                      + pos_list.size * pos_list.dtype.itemsize
                      + n * 4 + num_cores * 8 * 128 * 4)

    out = pl.pallas_call(
        kernel,
        out_shape=jax.ShapeDtypeStruct((num_cores, 8, 128), jnp.float32),
        grid_spec=pltpu.PrefetchScalarGridSpec(
            num_scalar_prefetch=0,
            grid=(num_cores, tiles_per_core),
            in_specs=[
                pl.BlockSpec((tile_n, c), lambda ci, ti: (tile_index(ci, ti), 0)),
                pl.BlockSpec((tile_n, 1), lambda ci, ti: (tile_index(ci, ti), 0)),
                pl.BlockSpec((tile_n, d), lambda ci, ti: (tile_index(ci, ti), 0)),
                pl.BlockSpec((tile_n, d), lambda ci, ti: (tile_index(ci, ti), 0)),
            ],
            out_specs=pl.BlockSpec((1, 8, 128), lambda ci, ti: (ci, 0, 0)),
            scratch_shapes=[
                pltpu.VMEM((1, c), jnp.float32),   # per-lane NLL partial sums
                pltpu.VMEM((1, d), jnp.float32),   # per-lane MSE partial sums
            ],
        ),
        compiler_params=pltpu.CompilerParams(
            dimension_semantics=("parallel", "arbitrary"),
            vmem_limit_bytes=int(vmem_limit),
        ),
        cost_estimate=pl.CostEstimate(
            flops=int(2 * n * c + 3 * n * d),
            transcendentals=0,
            bytes_accessed=int(bytes_accessed),
        ),
    )(classes, targets, positions, pos_list)
    return jnp.sum(out[:, 0, 0])


if __name__ == "__main__":
    key = jax.random.PRNGKey(0)
    keys = jax.random.split(key, 8)

    def make_inputs(k1, k2, k3, k4, n, c, d):
        logits = jax.random.normal(k1, (n, c), dtype=jnp.float32)
        classes = jax.nn.log_softmax(logits, axis=-1)
        class_list = jax.random.randint(k2, (n,), 0, c, dtype=jnp.int32)
        positions = jax.random.normal(k3, (n, d), dtype=jnp.float32)
        pos_list = jax.random.normal(k4, (n, d), dtype=jnp.float32)
        return classes, positions, class_list, pos_list

    def ref_loss(classes, positions, class_list, pos_list):
        n = classes.shape[0]
        nll = -jnp.mean(classes[jnp.arange(n), class_list])
        mse = jnp.mean((positions - pos_list) ** 2)
        return nll + mse

    # Small shapes consistent with the module: N=8 rows, C=16 classes, D=4 dims.
    c1, p1, cl1, pl1_ = make_inputs(*keys[:4], 8, 16, 4)
    loss1 = jax.block_until_ready(custom_loss(c1, p1, cl1, pl1_))
    ref1 = ref_loss(c1, p1, cl1, pl1_)
    assert jnp.allclose(loss1, ref1, rtol=1e-5, atol=1e-5), (loss1, ref1)

    # Multi-tile path (grid > 1 per core, clamped + partial tail block).
    c2, p2, cl2, pl2_ = make_inputs(*keys[4:8], 200, 16, 4)
    loss2 = jax.block_until_ready(custom_loss(c2, p2, cl2, pl2_, tile_n=64))
    ref2 = ref_loss(c2, p2, cl2, pl2_)
    assert jnp.allclose(loss2, ref2, rtol=1e-5, atol=1e-5), (loss2, ref2)

    print("KERNEL_OK")
</pallas_src>

<mosaic_0001>
module attributes {stable_mosaic.version = 11 : i64} {
  func.func @_loss_kernel(%arg0: i32, %arg1: i32, %arg2: memref<8x16xf32, #tpu.memory_space<vmem>>, %arg3: memref<8x1xi32, #tpu.memory_space<vmem>>, %arg4: memref<8x4xf32, #tpu.memory_space<vmem>>, %arg5: memref<8x4xf32, #tpu.memory_space<vmem>>, %arg6: memref<1x8x128xf32, #tpu.memory_space<vmem>>, %arg7: memref<1x16xf32, #tpu.memory_space<vmem>>, %arg8: memref<1x4xf32, #tpu.memory_space<vmem>>) attributes {dimension_semantics = [#tpu.dimension_semantics<parallel>, #tpu.dimension_semantics<arbitrary>], iteration_bounds = array<i64: 2, 1>, scalar_prefetch = 0 : i64, scratch_operands = 2 : i64, tpu.core_type = #tpu.core_type<tc>, window_params = [{transform_indices = @transform_0, window_bounds = array<i64: 8, 16>}, {transform_indices = @transform_1, window_bounds = array<i64: 8, 1>}, {transform_indices = @transform_2, window_bounds = array<i64: 8, 4>}, {transform_indices = @transform_3, window_bounds = array<i64: 8, 4>}, {transform_indices = @transform_4, window_bounds = array<i64: 1, 8, 128>}]} {
    %c0_i32 = arith.constant 0 : i32
    %0 = arith.cmpi eq, %arg1, %c0_i32 : i32
    %1 = arith.extui %0 : i1 to i32
    %c0_i32_0 = arith.constant 0 : i32
    %2 = arith.cmpi ne, %1, %c0_i32_0 : i32
    scf.if %2 {
      %cst_23 = arith.constant 0.000000e+00 : f32
      %43 = vector.broadcast %cst_23 : f32 to vector<1x16xf32>
      %c0_24 = arith.constant 0 : index
      %c0_25 = arith.constant 0 : index
      %44 = vector.load %arg7[%c0_24, %c0_25] : memref<1x16xf32, #tpu.memory_space<vmem>>, vector<1x16xf32>
      tpu.vector_store %arg7[%c0_24, %c0_25], %43 {strides = array<i32>} : memref<1x16xf32, #tpu.memory_space<vmem>>, vector<1x16xf32>,
      %cst_26 = arith.constant 0.000000e+00 : f32
      %45 = vector.broadcast %cst_26 : f32 to vector<1x4xf32>
      %c0_27 = arith.constant 0 : index
      %c0_28 = arith.constant 0 : index
      %46 = vector.load %arg8[%c0_27, %c0_28] : memref<1x4xf32, #tpu.memory_space<vmem>>, vector<1x4xf32>
      tpu.vector_store %arg8[%c0_27, %c0_28], %45 {strides = array<i32>} : memref<1x4xf32, #tpu.memory_space<vmem>>, vector<1x4xf32>,
    } else {
    }
    %c1_i32 = arith.constant 1 : i32
    %3 = arith.muli %arg0, %c1_i32 : i32
    %4 = arith.addi %3, %arg1 : i32
    %c8_i32 = arith.constant 8 : i32
    %5 = arith.muli %4, %c8_i32 : i32
    %c0 = arith.constant 0 : index
    %c0_1 = arith.constant 0 : index
    %6 = vector.load %arg2[%c0, %c0_1] : memref<8x16xf32, #tpu.memory_space<vmem>>, vector<8x16xf32>
    %c0_2 = arith.constant 0 : index
    %c0_3 = arith.constant 0 : index
    %7 = vector.load %arg3[%c0_2, %c0_3] : memref<8x1xi32, #tpu.memory_space<vmem>>, vector<8x1xi32>
    %8 = tpu.iota {dimensions = array<i32: 0>} : vector<8x16xi32>
    %9 = vector.broadcast %5 : i32 to vector<8x16xi32>
    %10 = arith.addi %8, %9 : vector<8x16xi32>
    %11 = tpu.iota {dimensions = array<i32: 1>} : vector<8x16xi32>
    %c8_i32_4 = arith.constant 8 : i32
    %12 = vector.broadcast %c8_i32_4 : i32 to vector<8x16xi32>
    %13 = arith.cmpi slt, %10, %12 : vector<8x16xi32>
    %14 = vector.broadcast %7 : vector<8x1xi32> to vector<8x16xi32>
    %15 = arith.cmpi eq, %11, %14 : vector<8x16xi32>
    %16 = arith.andi %13, %15 : vector<8x16xi1>
    %cst = arith.constant 0.000000e+00 : f32
    %17 = vector.broadcast %cst : f32 to vector<8x16xf32>
    %18 = arith.select %16, %6, %17 : vector<8x16xi1>, vector<8x16xf32>
    %c0_5 = arith.constant 0 : index
    %c0_6 = arith.constant 0 : index
    %19 = vector.load %arg7[%c0_5, %c0_6] : memref<1x16xf32, #tpu.memory_space<vmem>>, vector<1x16xf32>
    %cst_7 = arith.constant dense<0.000000e+00> : vector<16xf32>
    %20 = vector.multi_reduction <add>, %18, %cst_7 [0] : vector<8x16xf32> to vector<16xf32>
    %21 = vector.shape_cast %20 : vector<16xf32> to vector<1x16xf32>
    %22 = arith.addf %19, %21 : vector<1x16xf32>
    %c0_8 = arith.constant 0 : index
    %c0_9 = arith.constant 0 : index
    %23 = vector.load %arg7[%c0_8, %c0_9] : memref<1x16xf32, #tpu.memory_space<vmem>>, vector<1x16xf32>
    tpu.vector_store %arg7[%c0_8, %c0_9], %22 {strides = array<i32>} : memref<1x16xf32, #tpu.memory_space<vmem>>, vector<1x16xf32>,
    %c0_10 = arith.constant 0 : index
    %c0_11 = arith.constant 0 : index
    %24 = vector.load %arg4[%c0_10, %c0_11] : memref<8x4xf32, #tpu.memory_space<vmem>>, vector<8x4xf32>
    %c0_12 = arith.constant 0 : index
    %c0_13 = arith.constant 0 : index
    %25 = vector.load %arg5[%c0_12, %c0_13] : memref<8x4xf32, #tpu.memory_space<vmem>>, vector<8x4xf32>
    %26 = tpu.iota {dimensions = array<i32: 0>} : vector<8x4xi32>
    %27 = vector.broadcast %5 : i32 to vector<8x4xi32>
    %28 = arith.addi %26, %27 : vector<8x4xi32>
    %29 = arith.subf %24, %25 : vector<8x4xf32>
    %c8_i32_14 = arith.constant 8 : i32
    %30 = vector.broadcast %c8_i32_14 : i32 to vector<8x4xi32>
    %31 = arith.cmpi slt, %28, %30 : vector<8x4xi32>
    %32 = arith.mulf %29, %29 : vector<8x4xf32>
    %cst_15 = arith.constant 0.000000e+00 : f32
    %33 = vector.broadcast %cst_15 : f32 to vector<8x4xf32>
    %34 = arith.select %31, %32, %33 : vector<8x4xi1>, vector<8x4xf32>
    %c0_16 = arith.constant 0 : index
    %c0_17 = arith.constant 0 : index
    %35 = vector.load %arg8[%c0_16, %c0_17] : memref<1x4xf32, #tpu.memory_space<vmem>>, vector<1x4xf32>
    %cst_18 = arith.constant dense<0.000000e+00> : vector<4xf32>
    %36 = vector.multi_reduction <add>, %34, %cst_18 [0] : vector<8x4xf32> to vector<4xf32>
    %37 = vector.shape_cast %36 : vector<4xf32> to vector<1x4xf32>
    %38 = arith.addf %35, %37 : vector<1x4xf32>
    %c0_19 = arith.constant 0 : index
    %c0_20 = arith.constant 0 : index
    %39 = vector.load %arg8[%c0_19, %c0_20] : memref<1x4xf32, #tpu.memory_space<vmem>>, vector<1x4xf32>
    tpu.vector_store %arg8[%c0_19, %c0_20], %38 {strides = array<i32>} : memref<1x4xf32, #tpu.memory_space<vmem>>, vector<1x4xf32>,
    %c0_i32_21 = arith.constant 0 : i32
    %40 = arith.cmpi eq, %arg1, %c0_i32_21 : i32
    %41 = arith.extui %40 : i1 to i32
    %c0_i32_22 = arith.constant 0 : i32
    %42 = arith.cmpi ne, %41, %c0_i32_22 : i32
    scf.if %42 {
      %c0_23 = arith.constant 0 : index
      %c0_24 = arith.constant 0 : index
      %43 = vector.load %arg7[%c0_23, %c0_24] : memref<1x16xf32, #tpu.memory_space<vmem>>, vector<1x16xf32>
      %44 = vector.shape_cast %43 : vector<1x16xf32> to vector<1x1x16xf32>
      %cst_25 = arith.constant dense<0.000000e+00> : vector<1xf32>
      %45 = vector.multi_reduction <add>, %44, %cst_25 [1, 2] : vector<1x1x16xf32> to vector<1xf32>
      %46 = vector.shape_cast %45 : vector<1xf32> to vector<1x1x1xf32>
      %47 = vector.extract %46[0, 0, 0] : f32 from vector<1x1x1xf32>
      %c0_26 = arith.constant 0 : index
      %c0_27 = arith.constant 0 : index
      %48 = vector.load %arg8[%c0_26, %c0_27] : memref<1x4xf32, #tpu.memory_space<vmem>>, vector<1x4xf32>
      %49 = vector.shape_cast %48 : vector<1x4xf32> to vector<1x1x4xf32>
      %cst_28 = arith.constant dense<0.000000e+00> : vector<1xf32>
      %50 = vector.multi_reduction <add>, %49, %cst_28 [1, 2] : vector<1x1x4xf32> to vector<1xf32>
      %51 = vector.shape_cast %50 : vector<1xf32> to vector<1x1x1xf32>
      %52 = vector.extract %51[0, 0, 0] : f32 from vector<1x1x1xf32>
      %cst_29 = arith.constant 0.000000e+00 : f32
      %53 = arith.subf %cst_29, %47 : f32
      %cst_30 = arith.constant 1.250000e-01 : f32
      %54 = arith.mulf %53, %cst_30 : f32
      %cst_31 = arith.constant 3.125000e-02 : f32
      %55 = arith.mulf %52, %cst_31 : f32
      %56 = arith.addf %54, %55 : f32
      %57 = vector.broadcast %56 : f32 to vector<1x8x128xf32>
      %c0_32 = arith.constant 0 : index
      %c0_33 = arith.constant 0 : index
      %c0_34 = arith.constant 0 : index
      %58 = vector.load %arg6[%c0_32, %c0_33, %c0_34] : memref<1x8x128xf32, #tpu.memory_space<vmem>>, vector<1x8x128xf32>
      tpu.vector_store %arg6[%c0_32, %c0_33, %c0_34], %57 {strides = array<i32>} : memref<1x8x128xf32, #tpu.memory_space<vmem>>, vector<1x8x128xf32>,
    } else {
    }
    return
  }
  func.func @transform_0(%arg0: i32, %arg1: i32) -> (i32, i32) {
    %c1_i32 = arith.constant 1 : i32
    %0 = arith.muli %arg0, %c1_i32 : i32
    %1 = arith.addi %0, %arg1 : i32
    %c0_i32 = arith.constant 0 : i32
    %2 = arith.minsi %1, %c0_i32 : i32
    %c0_i32_0 = arith.constant 0 : i32
    %c0_i32_1 = arith.constant 0 : i32
    return %2, %c0_i32_0 : i32, i32
  }
  func.func @transform_1(%arg0: i32, %arg1: i32) -> (i32, i32) {
    %c1_i32 = arith.constant 1 : i32
    %0 = arith.muli %arg0, %c1_i32 : i32
    %1 = arith.addi %0, %arg1 : i32
    %c0_i32 = arith.constant 0 : i32
    %2 = arith.minsi %1, %c0_i32 : i32
    %c0_i32_0 = arith.constant 0 : i32
    %c0_i32_1 = arith.constant 0 : i32
    return %2, %c0_i32_0 : i32, i32
  }
  func.func @transform_2(%arg0: i32, %arg1: i32) -> (i32, i32) {
    %c1_i32 = arith.constant 1 : i32
    %0 = arith.muli %arg0, %c1_i32 : i32
    %1 = arith.addi %0, %arg1 : i32
    %c0_i32 = arith.constant 0 : i32
    %2 = arith.minsi %1, %c0_i32 : i32
    %c0_i32_0 = arith.constant 0 : i32
    %c0_i32_1 = arith.constant 0 : i32
    return %2, %c0_i32_0 : i32, i32
  }
  func.func @transform_3(%arg0: i32, %arg1: i32) -> (i32, i32) {
    %c1_i32 = arith.constant 1 : i32
    %0 = arith.muli %arg0, %c1_i32 : i32
    %1 = arith.addi %0, %arg1 : i32
    %c0_i32 = arith.constant 0 : i32
    %2 = arith.minsi %1, %c0_i32 : i32
    %c0_i32_0 = arith.constant 0 : i32
    %c0_i32_1 = arith.constant 0 : i32
    return %2, %c0_i32_0 : i32, i32
  }
  func.func @transform_4(%arg0: i32, %arg1: i32) -> (i32, i32, i32) {
    %c0_i32 = arith.constant 0 : i32
    %c0_i32_0 = arith.constant 0 : i32
    %c0_i32_1 = arith.constant 0 : i32
    return %arg0, %c0_i32, %c0_i32_0 : i32, i32, i32
  }
}

</mosaic_0001>

<llo_original>
// kernel: tpu_custom_call.1
$region0: #{tpu_custom_call.1}
  #allocation0 [shape = 'u32[]', space=smem, size = 0x4, offset = 0x4, fixed_abs, tag = 'smem constant byte address 0x4 - core index']
  #allocation1 [shape = 'u32[144,128]{1,0:T(1,128)}', space=vmem, size = 0x12000, scoped, tag = 'internal scratch']
  #allocation2 [shape = 'f32[1,16]{1,0:T(1,128)}', space=vmem, size = 0x200, scoped, tag = 'scratch operand']
  #allocation3 [shape = 'f32[1,4]{1,0:T(1,128)}', space=vmem, size = 0x200, scoped, tag = 'scratch operand']
  %s0 = inlined_call_operand.vmem [shape: f32[8,16], index: 0, kind: input, shape index: {}]
  %s1 = inlined_call_operand.vmem [shape: s32[8,1], index: 1, kind: input, shape index: {}]
  %s2 = inlined_call_operand.vmem [shape: f32[8,4], index: 2, kind: input, shape index: {}]
  %s3 = inlined_call_operand.vmem [shape: f32[8,4], index: 3, kind: input, shape index: {}]
  %s4 = inlined_call_operand.hbm [shape: f32[2,8,128], index: 4, kind: output, shape index: {}]
  %s5 = sld [smem:[#allocation0]]
  $region57: #{tpu_custom_call.1} parent=0
    _
  %s7 = ssub.s32 1, %s5
  %s8 = scalar_select 0, %s7, %s5
  $region1: #{tpu_custom_call.1} parent=0
    #allocation4 [shape = 'u8[8192]{0}', space=vmem, size = 0x2000, scoped, tag = 'output window, operand 0']
    #allocation5 [shape = 's32[2]{0}', space=sflag, size = 0x8, scoped, tag = 'scoped memory for tpu_custom_call.1']
    %9 = vsyncpa [#allocation5], 0
    %s10 = scalar_lea.sflag [#allocation5], 1
    %11 = vsyncpa %s10, 0
    loop: start=0, step=1, limit=4
    $region2: #{tpu_custom_call.1} parent=1 // loop_pre_header
      _
    $region3: #{tpu_custom_call.1} parent=1 // loop_header
      %s13 = sphi 0, %s17
      %p14 = scmp.ge.s32.totalorder %s13, 4
      %s20 = sphi 0, %s32
      %s21 = sphi 0, %s28
      %s22 = sphi 0, %s20
      %s23 = sphi 0, %s21
      %s24 = sphi 0, %s22
      %s25 = sphi 0, %s23
      %s41 = sphi 0, %s43
      %s44 = sphi 0, %s41
      %s45 = sphi 0, %s44
      %s61 = sphi 0, %s45
      %s73 = sphi 0, %s75
      %s76 = sphi 0, %s73
      %s77 = sphi 0, %s76
      %s93 = sphi 0, %s77
      %s105 = sphi 0, %s107
      %s108 = sphi 0, %s105
      %s109 = sphi 0, %s108
      %s125 = sphi 0, %s109
      %s137 = sphi 0, %s139
      %s140 = sphi 0, %s137
      %s141 = sphi 0, %s140
      %s157 = sphi 0, %s141
      %s163 = sphi 0, %s165
      %s166 = sphi 0, %s163
      %s167 = sphi 0, %s166
      %s183 = sphi 0, %s167
    $region4: #{tpu_custom_call.1} parent=1 // loop_header_branch
      %16 = sbr.rel (%p14) target = $region8
    $region5: #{tpu_custom_call.1} parent=1 // loop_body
      %s18 = ssub.s32 %s13, 1
      %s19 = ssub.s32 %s13, 2
      %s26 = sadd.s32 1, %s21
      %p27 = scmp.ge.s32.totalorder %s26, 1
      %s28 = scalar_select %p27, 0, %s26
      %s29 = sadd.s32 1, %s20
      %s30 = scalar_select %p27, %s29, %s20
      %p31 = scmp.ge.s32.totalorder %s30, 2
      %s32 = scalar_select %p31, 0, %s30
      %s33 = sadd.s32 %s20, %s21
      %p34 = scmp.lt.s32.totalorder %s33, 0
      %s35 = scalar_select %p34, %s33, 0
      %s36 = sadd.s32 %s32, %s28
      %p37 = scmp.lt.s32.totalorder %s36, 0
      %s38 = scalar_select %p37, %s36, 0
      %s39 = ssub.s32 %s35, %s38
      %p40 = scmp.eq.s32.totalorder %s39, 0
      %s42 = sadd.s32 %s41, 1
      %s43 = scalar_select %p40, %s41, %s42
      %p46 = pneg %p40
      %p47 = scmp.eq.s32.totalorder %s13, 1
      %p48 = por %p46, %p47
      %p49 = scmp.ne.s32.totalorder %s41, %s44
      %p50 = scmp.eq.s32.totalorder %s13, 0
      %p51 = por %p49, %p50
      %p52 = scmp.ne.s32.totalorder %s41, %s44
      %p53 = scmp.eq.s32.totalorder %s18, 1
      %p54 = por %p52, %p53
      %p55 = scmp.ne.s32.totalorder %s44, %s45
      %p56 = scmp.eq.s32.totalorder %s18, 0
      %p57 = por %p55, %p56
      %p58 = scmp.ne.s32.totalorder %s44, %s45
      %p59 = scmp.eq.s32.totalorder %s19, 1
      %p60 = por %p58, %p59
      %p62 = scmp.ne.s32.totalorder %s45, %s61
      %p63 = scmp.eq.s32.totalorder %s19, 0
      %p64 = por %p62, %p63
      %s65 = sadd.s32 %s20, %s21
      %p66 = scmp.lt.s32.totalorder %s65, 0
      %s67 = scalar_select %p66, %s65, 0
      %s68 = sadd.s32 %s32, %s28
      %p69 = scmp.lt.s32.totalorder %s68, 0
      %s70 = scalar_select %p69, %s68, 0
      %s71 = ssub.s32 %s67, %s70
      %p72 = scmp.eq.s32.totalorder %s71, 0
      %s74 = sadd.s32 %s73, 1
      %s75 = scalar_select %p72, %s73, %s74
      %p78 = pneg %p72
      %p79 = scmp.eq.s32.totalorder %s13, 1
      %p80 = por %p78, %p79
      %p81 = scmp.ne.s32.totalorder %s73, %s76
      %p82 = scmp.eq.s32.totalorder %s13, 0
      %p83 = por %p81, %p82
      %p84 = scmp.ne.s32.totalorder %s73, %s76
      %p85 = scmp.eq.s32.totalorder %s18, 1
      %p86 = por %p84, %p85
      %p87 = scmp.ne.s32.totalorder %s76, %s77
      %p88 = scmp.eq.s32.totalorder %s18, 0
      %p89 = por %p87, %p88
      %p90 = scmp.ne.s32.totalorder %s76, %s77
      %p91 = scmp.eq.s32.totalorder %s19, 1
      %p92 = por %p90, %p91
      %p94 = scmp.ne.s32.totalorder %s77, %s93
      %p95 = scmp.eq.s32.totalorder %s19, 0
      %p96 = por %p94, %p95
      %s97 = sadd.s32 %s20, %s21
      %p98 = scmp.lt.s32.totalorder %s97, 0
      %s99 = scalar_select %p98, %s97, 0
      %s100 = sadd.s32 %s32, %s28
      %p101 = scmp.lt.s32.totalorder %s100, 0
      %s102 = scalar_select %p101, %s100, 0
      %s103 = ssub.s32 %s99, %s102
      %p104 = scmp.eq.s32.totalorder %s103, 0
      %s106 = sadd.s32 %s105, 1
      %s107 = scalar_select %p104, %s105, %s106
      %p110 = pneg %p104
      %p111 = scmp.eq.s32.totalorder %s13, 1
      %p112 = por %p110, %p111
      %p113 = scmp.ne.s32.totalorder %s105, %s108
      %p114 = scmp.eq.s32.totalorder %s13, 0
      %p115 = por %p113, %p114
      %p116 = scmp.ne.s32.totalorder %s105, %s108
      %p117 = scmp.eq.s32.totalorder %s18, 1
      %p118 = por %p116, %p117
      %p119 = scmp.ne.s32.totalorder %s108, %s109
      %p120 = scmp.eq.s32.totalorder %s18, 0
      %p121 = por %p119, %p120
      %p122 = scmp.ne.s32.totalorder %s108, %s109
      %p123 = scmp.eq.s32.totalorder %s19, 1
      %p124 = por %p122, %p123
      %p126 = scmp.ne.s32.totalorder %s109, %s125
      %p127 = scmp.eq.s32.totalorder %s19, 0
      %p128 = por %p126, %p127
      %s129 = sadd.s32 %s20, %s21
      %p130 = scmp.lt.s32.totalorder %s129, 0
      %s131 = scalar_select %p130, %s129, 0
      %s132 = sadd.s32 %s32, %s28
      %p133 = scmp.lt.s32.totalorder %s132, 0
      %s134 = scalar_select %p133, %s132, 0
      %s135 = ssub.s32 %s131, %s134
      %p136 = scmp.eq.s32.totalorder %s135, 0
      %s138 = sadd.s32 %s137, 1
      %s139 = scalar_select %p136, %s137, %s138
      %p142 = pneg %p136
      %p143 = scmp.eq.s32.totalorder %s13, 1
      %p144 = por %p142, %p143
      %p145 = scmp.ne.s32.totalorder %s137, %s140
      %p146 = scmp.eq.s32.totalorder %s13, 0
      %p147 = por %p145, %p146
      %p148 = scmp.ne.s32.totalorder %s137, %s140
      %p149 = scmp.eq.s32.totalorder %s18, 1
      %p150 = por %p148, %p149
      %p151 = scmp.ne.s32.totalorder %s140, %s141
      %p152 = scmp.eq.s32.totalorder %s18, 0
      %p153 = por %p151, %p152
      %p154 = scmp.ne.s32.totalorder %s140, %s141
      %p155 = scmp.eq.s32.totalorder %s19, 1
      %p156 = por %p154, %p155
      %p158 = scmp.ne.s32.totalorder %s141, %s157
      %p159 = scmp.eq.s32.totalorder %s19, 0
      %p160 = por %p158, %p159
      %s161 = ssub.s32 %s20, %s32
      %p162 = scmp.eq.s32.totalorder %s161, 0
      %s164 = sadd.s32 %s163, 1
      %s165 = scalar_select %p162, %s163, %s164
      %p168 = pneg %p162
      %p169 = scmp.eq.s32.totalorder %s13, 1
      %p170 = por %p168, %p169
      %p171 = scmp.ne.s32.totalorder %s163, %s166
      %p172 = scmp.eq.s32.totalorder %s13, 0
      %p173 = por %p171, %p172
      %p174 = scmp.ne.s32.totalorder %s163, %s166
      %p175 = scmp.eq.s32.totalorder %s18, 1
      %p176 = por %p174, %p175
      %p177 = scmp.ne.s32.totalorder %s166, %s167
      %p178 = scmp.eq.s32.totalorder %s18, 0
      %p179 = por %p177, %p178
      %p180 = scmp.ne.s32.totalorder %s166, %s167
      %p181 = scmp.eq.s32.totalorder %s19, 1
      %p182 = por %p180, %p181
      %p184 = scmp.ne.s32.totalorder %s167, %s183
      %p185 = scmp.eq.s32.totalorder %s19, 0
      %p186 = por %p184, %p185
      %p187 = scmp.le.s32.totalorder 1, %s13
      %p188 = scmp.lt.s32.totalorder %s13, 3
      %p189 = pnand %p187, %p188
      %p190 = pneg %p189
      // Predicated region
      $region9: #{tpu_custom_call.1} parent=5 // pred_check
        _
      $region10: #{tpu_custom_call.1} parent=5 // pred_check_branch
        %192 = sbr.rel (%p189) target = $region12
      $region11: #{tpu_custom_call.1} parent=5 // pred_region
        %s193 = ssub.s32 %s13, 1
      $region12: #{tpu_custom_call.1} parent=5 // pred_fallthru
        _
      %p194 = scmp.lt.s32.totalorder %s13, 2
      // Predicated region
      $region13: #{tpu_custom_call.1} parent=5 // pred_check
        %p195 = pneg %p194
      $region14: #{tpu_custom_call.1} parent=5 // pred_check_branch
        %197 = sbr.rel (%p195) target = $region16
      $region15: #{tpu_custom_call.1} parent=5 // pred_region
        // Predicated region
        $region17: #{tpu_custom_call.1} parent=15 // pred_check
          %p198 = pneg %p51
        $region18: #{tpu_custom_call.1} parent=15 // pred_check_branch
          %200 = sbr.rel (%p198) target = $region20
        $region19: #{tpu_custom_call.1} parent=15 // pred_region
          %s201 = sadd.s32 %s20, %s21
          %p202 = scmp.lt.s32.totalorder %s201, 0
          %s203 = scalar_select %p202, %s201, 0
          %p204 = scmp.lt.s32.totalorder %s203, 0
          %s205 = scalar_select %p204, %s203, 0
          %s206 = smul.addr %s205, 8
          %s207 = scalar_lea.vmem %s0, %s206
          %s208 = sadd.s32 %s20, %s21
          %p209 = scmp.lt.s32.totalorder %s208, 0
          %s210 = scalar_select %p209, %s208, 0
        $region20: #{tpu_custom_call.1} parent=15 // pred_fallthru
          _
        // Predicated region
        $region21: #{tpu_custom_call.1} parent=15 // pred_check
          %p211 = pneg %p83
        $region22: #{tpu_custom_call.1} parent=15 // pred_check_branch
          %213 = sbr.rel (%p211) target = $region24
        $region23: #{tpu_custom_call.1} parent=15 // pred_region
          %s214 = sadd.s32 %s20, %s21
          %p215 = scmp.lt.s32.totalorder %s214, 0
          %s216 = scalar_select %p215, %s214, 0
          %p217 = scmp.lt.s32.totalorder %s216, 0
          %s218 = scalar_select %p217, %s216, 0
          %s219 = smul.addr %s218, 8
          %s220 = scalar_lea.vmem %s1, %s219
          %s221 = sadd.s32 %s20, %s21
          %p222 = scmp.lt.s32.totalorder %s221, 0
          %s223 = scalar_select %p222, %s221, 0
        $region24: #{tpu_custom_call.1} parent=15 // pred_fallthru
          _
        // Predicated region
        $region25: #{tpu_custom_call.1} parent=15 // pred_check
          %p224 = pneg %p115
        $region26: #{tpu_custom_call.1} parent=15 // pred_check_branch
          %226 = sbr.rel (%p224) target = $region28
        $region27: #{tpu_custom_call.1} parent=15 // pred_region
          %s227 = sadd.s32 %s20, %s21
          %p228 = scmp.lt.s32.totalorder %s227, 0
          %s229 = scalar_select %p228, %s227, 0
          %p230 = scmp.lt.s32.totalorder %s229, 0
          %s231 = scalar_select %p230, %s229, 0
          %s232 = smul.addr %s231, 8
          %s233 = scalar_lea.vmem %s2, %s232
          %s234 = sadd.s32 %s20, %s21
          %p235 = scmp.lt.s32.totalorder %s234, 0
          %s236 = scalar_select %p235, %s234, 0
        $region28: #{tpu_custom_call.1} parent=15 // pred_fallthru
          _
        // Predicated region
        $region29: #{tpu_custom_call.1} parent=15 // pred_check
          %p237 = pneg %p147
        $region30: #{tpu_custom_call.1} parent=15 // pred_check_branch
          %239 = sbr.rel (%p237) target = $region32
        $region31: #{tpu_custom_call.1} parent=15 // pred_region
          %s240 = sadd.s32 %s20, %s21
          %p241 = scmp.lt.s32.totalorder %s240, 0
          %s242 = scalar_select %p241, %s240, 0
          %p243 = scmp.lt.s32.totalorder %s242, 0
          %s244 = scalar_select %p243, %s242, 0
          %s245 = smul.addr %s244, 8
          %s246 = scalar_lea.vmem %s3, %s245
          %s247 = sadd.s32 %s20, %s21
          %p248 = scmp.lt.s32.totalorder %s247, 0
          %s249 = scalar_select %p248, %s247, 0
        $region32: #{tpu_custom_call.1} parent=15 // pred_fallthru
          _
      $region16: #{tpu_custom_call.1} parent=5 // pred_fallthru
        _
      %p250 = scmp.le.s32.totalorder 1, %s13
      %p251 = scmp.lt.s32.totalorder %s13, 3
      %p252 = pnand %p250, %p251
      %p253 = pneg %p252
      // Predicated region
      $region33: #{tpu_custom_call.1} parent=5 // pred_check
        _
      $region34: #{tpu_custom_call.1} parent=5 // pred_check_branch
        %255 = sbr.rel (%p252) target = $region36
      $region35: #{tpu_custom_call.1} parent=5 // pred_region
        %s256 = ssub.s32 %s13, 1
        %s257 = sadd.s32 %s22, %s23
        %p258 = scmp.lt.s32.totalorder %s257, 0
        %s259 = scalar_select %p258, %s257, 0
        %p260 = scmp.lt.s32.totalorder %s259, 0
        %s261 = scalar_select %p260, %s259, 0
        %s262 = smul.addr %s261, 8
        %s263 = scalar_lea.vmem %s0, %s262
        %p264 = pneg %p57
        %p265 = pneg %p54
        %s266 = sadd.s32 %s22, %s23
        %p267 = scmp.lt.s32.totalorder %s266, 0
        %s268 = scalar_select %p267, %s266, 0
        %p269 = scmp.lt.s32.totalorder %s268, 0
        %s270 = scalar_select %p269, %s268, 0
        %s271 = smul.addr %s270, 8
        %s272 = scalar_lea.vmem %s1, %s271
        %p273 = pneg %p89
        %p274 = pneg %p86
        %s275 = sadd.s32 %s22, %s23
        %p276 = scmp.lt.s32.totalorder %s275, 0
        %s277 = scalar_select %p276, %s275, 0
        %p278 = scmp.lt.s32.totalorder %s277, 0
        %s279 = scalar_select %p278, %s277, 0
        %s280 = smul.addr %s279, 8
        %s281 = scalar_lea.vmem %s2, %s280
        %p282 = pneg %p121
        %p283 = pneg %p118
        %s284 = sadd.s32 %s22, %s23
        %p285 = scmp.lt.s32.totalorder %s284, 0
        %s286 = scalar_select %p285, %s284, 0
        %p287 = scmp.lt.s32.totalorder %s286, 0
        %s288 = scalar_select %p287, %s286, 0
        %s289 = smul.addr %s288, 8
        %s290 = scalar_lea.vmem %s3, %s289
        %p291 = pneg %p153
        %p292 = pneg %p150
        %p293 = pneg %p179
        %p294 = pneg %p176
        %s295 = sand.u32 %s166, 1
        %s296 = scalar_lea.sflag [#allocation5], %s295
        %s297 = sand.u32 %s166, 1
        %s298 = smul.addr %s297, 8
        %s299 = scalar_lea.vmem [#allocation4], %s298
        %s300 = sadd.s32 %s22, %s23
        %p301 = scmp.lt.s32.totalorder %s300, 0
        %s302 = scalar_select %p301, %s300, 0
        %p303 = scmp.lt.s32.totalorder %s302, 0
        %s304 = scalar_select %p303, %s302, 0
        %s305 = smul.addr %s304, 8
        %s306 = scalar_lea.vmem %s0, %s305
        %s307 = sadd.s32 %s22, %s23
        %p308 = scmp.lt.s32.totalorder %s307, 0
        %s309 = scalar_select %p308, %s307, 0
        %s310 = sadd.s32 %s22, %s23
        %p311 = scmp.lt.s32.totalorder %s310, 0
        %s312 = scalar_select %p311, %s310, 0
        %p313 = scmp.lt.s32.totalorder %s312, 0
        %s314 = scalar_select %p313, %s312, 0
        %s315 = smul.addr %s314, 8
        %s316 = scalar_lea.vmem %s1, %s315
        %s317 = sadd.s32 %s22, %s23
        %p318 = scmp.lt.s32.totalorder %s317, 0
        %s319 = scalar_select %p318, %s317, 0
        %s320 = sadd.s32 %s22, %s23
        %p321 = scmp.lt.s32.totalorder %s320, 0
        %s322 = scalar_select %p321, %s320, 0
        %p323 = scmp.lt.s32.totalorder %s322, 0
        %s324 = scalar_select %p323, %s322, 0
        %s325 = smul.addr %s324, 8
        %s326 = scalar_lea.vmem %s2, %s325
        %s327 = sadd.s32 %s22, %s23
        %p328 = scmp.lt.s32.totalorder %s327, 0
        %s329 = scalar_select %p328, %s327, 0
        %s330 = sadd.s32 %s22, %s23
        %p331 = scmp.lt.s32.totalorder %s330, 0
        %s332 = scalar_select %p331, %s330, 0
        %p333 = scmp.lt.s32.totalorder %s332, 0
        %s334 = scalar_select %p333, %s332, 0
        %s335 = smul.addr %s334, 8
        %s336 = scalar_lea.vmem %s3, %s335
        %s337 = sadd.s32 %s22, %s23
        %p338 = scmp.lt.s32.totalorder %s337, 0
        %s339 = scalar_select %p338, %s337, 0
        %p340 = scmp.eq.s32.totalorder %s23, 0
        // Predicated region
        $region37: #{tpu_custom_call.1} parent=35 // pred_check
          %p341 = pneg %p340
        $region38: #{tpu_custom_call.1} parent=35 // pred_check_branch
          %343 = sbr.rel (%p341) target = $region40
        $region39: #{tpu_custom_call.1} parent=35 // pred_region
          %vm344 = vcmask 122880
          %345 = vst.msk [vmem:[#allocation2] sm:$0x1] %vm344, 0.0
          %vm346 = vcmask 24576
          %347 = vst.msk [vmem:[#allocation3] sm:$0x1] %vm346, 0.0
        $region40: #{tpu_custom_call.1} parent=35 // pred_fallthru
          _
        %s348 = sadd.s32 %s22, %s23
        %s349 = smul.u32 %s348, 8
        %v350 = vld [vmem:[%s306] sm:$0xff]
        %v351 = vld [vmem:[%s316] sm:$0xff]
        %v352 = vlaneseq
        %v353 = vshrl.u32 %v352, 7
        %v354 = vstv %s349
        %v355 = vadd.s32 %v353, %v354
        %v356 = vlaneseq
        %v357 = vand.u32 %v356, 127
        %vm358 = vcmp.lt.s32.totalorder %v355, 8
        %359 = vset.pattern.permute.xlu0 0
        %360 = vperm.xlu0 %359, %v351
        %v361 = vpop.permute.xlu0 %360
        %vm362 = vcmp.eq.s32.totalorder %v357, %v361
        %vm363 = vmand %vm358, %vm362
        %v364 = vsel %vm363, %v350, 0.0
        %v365 = vld [vmem:[#allocation2] sm:$0x1]
        %vm366 = vcmask 130048
        %v367 = vsel %vm366, %v364, 0.0
        %v368 = vrot.slane %v367, 4
        %v369 = vadd.f32 %v367, %v368
        %v370 = vrot.slane %v369, 2
        %v371 = vadd.f32 %v369, %v370
        %v372 = vrot.slane %v371, 1
        %v373 = vadd.f32 %v371, %v372
        %v374 = vadd.f32 %v365, %v373
        %vm375 = vcmask 122880
        %376 = vst.msk [vmem:[#allocation2] sm:$0x1] %vm375, %v374
        %v377 = vld [vmem:[%s326] sm:$0xff]
        %v378 = vld [vmem:[%s336] sm:$0xff]
        %v379 = vsub.f32 %v377, %v378
        %v380 = vmul.f32 %v379, %v379
        %v381 = vsel %vm358, %v380, 0.0
        %v382 = vld [vmem:[#allocation3] sm:$0x1]
        %vm383 = vcmask 31744
        %v384 = vsel %vm383, %v381, 0.0
        %v385 = vrot.slane %v384, 4
        %v386 = vadd.f32 %v384, %v385
        %v387 = vrot.slane %v386, 2
        %v388 = vadd.f32 %v386, %v387
        %v389 = vrot.slane %v388, 1
        %v390 = vadd.f32 %v388, %v389
        %v391 = vadd.f32 %v382, %v390
        %vm392 = vcmask 24576
        %393 = vst.msk [vmem:[#allocation3] sm:$0x1] %vm392, %v391
        // Predicated region
        $region41: #{tpu_custom_call.1} parent=35 // pred_check
          %p394 = pneg %p340
        $region42: #{tpu_custom_call.1} parent=35 // pred_check_branch
          %396 = sbr.rel (%p394) target = $region44
        $region43: #{tpu_custom_call.1} parent=35 // pred_region
          %v397 = vld [vmem:[#allocation2] sm:$0x1]
          %v398 = vsel %vm375, %v397, 0.0
          %399 = vadd.xlane.f32.xlu0 %v398
          %v400 = vpop.xlane.xlu0 %399
          %v401 = vrot.slane %v400, 4
          %v402 = vadd.f32 %v400, %v401
          %v403 = vrot.slane %v402, 2
          %v404 = vadd.f32 %v402, %v403
          %v405 = vrot.slane %v404, 1
          %v406 = vadd.f32 %v404, %v405
          %s407 = vtos %v406
          %v408 = vld [vmem:[#allocation3] sm:$0x1]
          %v409 = vsel %vm392, %v408, 0.0
          %410 = vadd.xlane.f32.xlu0 %v409
          %v411 = vpop.xlane.xlu0 %410
          %v412 = vrot.slane %v411, 4
          %v413 = vadd.f32 %v411, %v412
          %v414 = vrot.slane %v413, 2
          %v415 = vadd.f32 %v413, %v414
          %v416 = vrot.slane %v415, 1
          %v417 = vadd.f32 %v415, %v416
          %s418 = vtos %v417
          %s419 = ssub.f32 0.0, %s407
          %s420 = smul.f32 %s419, 0.125
          %s421 = smul.f32 %s418, 0.03125
          %s422 = sadd.f32 %s420, %s421
          %v423 = vstv %s422
          %424 = vst [vmem:[%s299] sm:$0xff] %v423
        $region44: #{tpu_custom_call.1} parent=35 // pred_fallthru
          _
        %s425 = sand.u32 %s166, 1
        %s426 = scalar_lea.sflag [#allocation5], %s425
        %s427 = sand.u32 %s166, 1
        %s428 = smul.addr %s427, 8
        %s429 = scalar_lea.vmem [#allocation4], %s428
        // Predicated region
        $region45: #{tpu_custom_call.1} parent=35 // pred_check
          %p430 = pneg %p176
        $region46: #{tpu_custom_call.1} parent=35 // pred_check_branch
          %432 = sbr.rel (%p430) target = $region48
        $region47: #{tpu_custom_call.1} parent=35 // pred_region
          %s434 = ssub.s32 128, 128
          %435 = vsyncadd %s426, %s434
          %s436 = smul.addr %s22, 128
          %s437 = scalar_lea.hbm %s4, %s436
          %s439 = sshll.u32 %s429, 4
          %s440 = int_to_ptr.vmem [resolvable:$true] %s439
          %442 = dma.vmem_to_hbm [thread:$0]  %s440, 128, %s437, %s426
        $region48: #{tpu_custom_call.1} parent=35 // pred_fallthru
          _
      $region36: #{tpu_custom_call.1} parent=5 // pred_fallthru
        _
      %p443 = scmp.le.s32.totalorder 2, %s13
      // Predicated region
      $region49: #{tpu_custom_call.1} parent=5 // pred_check
        %p444 = pneg %p443
      $region50: #{tpu_custom_call.1} parent=5 // pred_check_branch
        %446 = sbr.rel (%p444) target = $region52
      $region51: #{tpu_custom_call.1} parent=5 // pred_region
        %s447 = ssub.s32 %s13, 2
        // Predicated region
        $region53: #{tpu_custom_call.1} parent=51 // pred_check
          %p448 = pneg %p182
        $region54: #{tpu_custom_call.1} parent=51 // pred_check_branch
          %450 = sbr.rel (%p448) target = $region56
        $region55: #{tpu_custom_call.1} parent=51 // pred_region
          %s451 = sand.u32 %s167, 1
          %s452 = scalar_lea.sflag [#allocation5], %s451
          %s453 = sand.u32 %s167, 1
          %s454 = smul.addr %s453, 8
          %s455 = scalar_lea.vmem [#allocation4], %s454
          %456 = dma.done %s452, 128
        $region56: #{tpu_custom_call.1} parent=51 // pred_fallthru
          _
      $region52: #{tpu_custom_call.1} parent=5 // pred_fallthru
        _
    $region6: #{tpu_custom_call.1} parent=1 // loop_footer
      %s17 = sadd.s32 1, %s13
    $region7: #{tpu_custom_call.1} parent=1 // loop_footer_branch
      %12 = sbr.rel target = $region3
    $region8: #{tpu_custom_call.1} parent=1 // loop_exit
      _
    %457 = vsyncpa [#allocation5], 1
    %s458 = scalar_lea.sflag [#allocation5], 1
    %459 = vsyncpa %s458, 1

</llo_original>
